<compile_context>
chip_gen: v6e
topology: v6e:2x2x1
jax: 0.10.0
libtpu: 0.0.40
codegen_flags: <defaults>
</compile_context>

<pallas_src>
import math
import functools

import jax
import jax.numpy as jnp
from jax.experimental import pallas as pl
from jax.experimental.pallas import tpu as pltpu

_LOG_2PI = math.log(2.0 * math.pi)
_SQRT_HALF = math.sqrt(0.5)


def _gmm_loss_kernel(out_ref, emt_ref, bgt_ref, o_ref,
                     m_sc, l_sc, ps_sc, pv_sc, bg_sc, *, K, W, ragged):
    """One (batch b, K-tile k) grid step.

    out_ref : (1, C, kt)    feature maps, spatial dims flattened row-major
    emt_ref : (1, Mpad, 3)  per-emitter [x, y, mask] (pad rows have mask = 0)
    bgt_ref : (1, 1, kt)    background truth
    o_ref   : (1, 1, 8)     per-batch partials [gmm_sum, count_raw, bg_sse, 0...]
    m_sc/l_sc               online-logsumexp state per emitter, (Mpad, 1)
    ps/pv/bg_sc             running sum(prob), sum(prob - prob^2), bg SSE, (1, 1)
    """
    kt = out_ref.shape[2]
    k_idx = pl.program_id(1)
    nk = pl.num_programs(1)

    # ---- init accumulators at the start of each batch element's K sweep ----
    @pl.when(k_idx == 0)
    def _():
        m_sc[...] = jnp.full_like(m_sc, -jnp.inf)
        l_sc[...] = jnp.zeros_like(l_sc)
        ps_sc[...] = jnp.zeros_like(ps_sc)
        pv_sc[...] = jnp.zeros_like(pv_sc)
        bg_sc[...] = jnp.zeros_like(bg_sc)

    # ---- unpack the per-pixel (1, kt) channels for this K tile ----
    prob = out_ref[0, 0:1, :]      # detection probability map
    dx = out_ref[0, 1:2, :]        # x offset (relative to pixel center)
    dy = out_ref[0, 2:3, :]        # y offset
    sigx = out_ref[0, 3:4, :]      # x sigma
    sigy = out_ref[0, 4:5, :]      # y sigma
    bg = out_ref[0, 5:6, :]        # background prediction
    diff = bg - bgt_ref[0]
    # channels 6 (N) / 7 (N_sig) are unused by the reference loss.

    kk = k_idx * kt + jax.lax.broadcasted_iota(jnp.int32, (1, kt), 1)

    if ragged:
        # Emitted only when K % kt != 0 (trace-time constant).  The last tile
        # reads past the true K extent, so sanitize the garbage lanes with
        # NaN-safe selects: prob -> 0 gives c = log(0) = -inf (kills the LSE
        # term and the counting sums naturally); sigma -> 1, dx/dy -> 0 keep
        # every intermediate finite so no NaN can poison lp.
        valid = kk < K
        prob = jnp.where(valid, prob, 0.0)
        sigx = jnp.where(valid, sigx, 1.0)
        sigy = jnp.where(valid, sigy, 1.0)
        dx = jnp.where(valid, dx, 0.0)
        dy = jnp.where(valid, dy, 0.0)
        diff = jnp.where(valid, diff, 0.0)

    # ---- streaming counting-loss / background-SSE scalars ----
    ps_sc[...] += jnp.sum(prob, keepdims=True)
    pv_sc[...] += jnp.sum(prob - prob * prob, keepdims=True)
    bg_sc[...] += jnp.sum(diff * diff, keepdims=True)

    # ---- pixel-center coordinates from the flat index k = i*W + j ----
    kkf = kk.astype(jnp.float32)
    # floor((k + 0.5) * (1/W)) == k // W exactly for K < 2^22 -> no fix-ups.
    gi = jnp.floor((kkf + 0.5) * jnp.float32(1.0 / W))
    gj = kkf - gi * jnp.float32(W)
    mux = dx + (gi + 0.5)                              # absolute component means
    muy = dy + (gj + 0.5)

    # ---- hoisted per-pixel (1, kt) quantities ----
    # approx reciprocal -> EUP slot (the VALU is the binding slot, EUP is idle)
    isx = pl.reciprocal(sigx, approx=True)
    isy = pl.reciprocal(sigy, approx=True)
    # per-pixel additive constant: log(prob) - log(sx*sy) - log(2*pi)
    c = jnp.log(prob * isx * isy) - _LOG_2PI
    # fold sqrt(0.5) into the reciprocals so the hot loop has no *(-0.5)
    isx = isx * _SQRT_HALF
    isy = isy * _SQRT_HALF

    # ---- (Mpad, kt) hot loop ----
    tx = emt_ref[0, :, 0:1]                            # (Mpad, 1)
    ty = emt_ref[0, :, 1:2]
    zx = (tx - mux) * isx                              # (Mpad, kt)
    zy = (ty - muy) * isy
    lp = (c - zx * zx) - zy * zy                       # unnormalized mixture logpdf

    # ---- online logsumexp over the K axis ----
    m_prev = m_sc[...]
    m_new = jnp.maximum(m_prev, jnp.max(lp, axis=-1, keepdims=True))
    m_safe = jnp.where(m_new == -jnp.inf, 0.0, m_new)  # all -inf guard (no NaN)
    l_sc[...] = (l_sc[...] * jnp.exp(m_prev - m_safe)
                 + jnp.sum(jnp.exp(lp - m_safe), axis=-1, keepdims=True))
    m_sc[...] = m_new

    # ---- finalize: combine and emit one (1, 8) row per batch element ----
    @pl.when(k_idx == nk - 1)
    def _():
        maskv = emt_ref[0, :, 2:3]                     # (Mpad, 1)
        prob_sum = ps_sc[...]                          # (1, 1)
        # mixture-weight normalisation -log(sum(prob)) applied once here
        lse = m_sc[...] + jnp.log(l_sc[...]) - jnp.log(prob_sum)
        gmm = jnp.sum(-lse * maskv, keepdims=True)     # (1, 1)
        n = jnp.sum(maskv, keepdims=True)              # (1, 1) number of emitters
        sigma_p = jnp.sqrt(pv_sc[...])
        log_prob_n = (-0.5 * ((n - prob_sum) / sigma_p) ** 2
                      - jnp.log(sigma_p) - 0.5 * _LOG_2PI)
        c_term = -log_prob_n * n                       # raw counting term
        lane = jax.lax.broadcasted_iota(jnp.int32, (1, 8), 1)
        o_ref[0] = (jnp.where(lane == 0, gmm, 0.0)
                    + jnp.where(lane == 1, c_term, 0.0)
                    + jnp.where(lane == 2, bg_sc[...], 0.0))


def gmm_loss(output, pos, mask, bg_truth, seperate=False, k_tile=None):
    """output: (B, 8, H, W) NCHW; pos: (B, M, 3); mask: (B, M); bg_truth: (B, H, W)."""
    output = output.astype(jnp.float32)
    B, C, H, W = output.shape
    K = H * W
    assert K < (1 << 22), "pixel-index float math assumes H*W < 2**22"

    # Pure reshapes / dtype no-ops: no wrapper-side HBM copy, no padding.
    out_flat = output.reshape(B, C, K)
    bgt = bg_truth.astype(jnp.float32).reshape(B, 1, K)

    pos3 = pos.reshape(B, -1, 3).astype(jnp.float32)
    M = pos3.shape[1]
    mask2 = mask.reshape(B, M).astype(jnp.float32)
    emt = jnp.concatenate([pos3[:, :, 0:2], mask2[:, :, None]], axis=-1)  # (B, M, 3)
    m_pad = max(8, -(-M // 8) * 8)
    if m_pad != M:
        emt = jnp.pad(emt, ((0, 0), (0, m_pad - M), (0, 0)))   # pad rows -> mask 0

    # Lane tile: multiple of 128, scaled down with the emitter count so the live
    # (m_pad, kt) f32 temporaries (zx, zy, lp, exp) stay near the vreg file size.
    if k_tile is None:
        k_tile = max(512, min(4096, (262144 // (4 * m_pad)) // 128 * 128))
    k_tile = max(128, (int(k_tile) // 128) * 128)
    if K <= k_tile:
        kt = K          # single full-extent block: always layout-legal, never ragged
    else:
        kt = k_tile
    n_kt = pl.cdiv(K, kt)
    ragged = (K % kt) != 0      # last tile reads past K -> in-kernel masking emitted

    kernel = functools.partial(_gmm_loss_kernel, K=K, W=W, ragged=ragged)

    grid_spec = pltpu.PrefetchScalarGridSpec(
        num_scalar_prefetch=0,
        grid=(B, n_kt),
        in_specs=[
            pl.BlockSpec((1, C, kt), lambda b, k: (b, 0, k)),      # feature maps
            pl.BlockSpec((1, m_pad, 3), lambda b, k: (b, 0, 0)),   # emitters [x,y,mask]
            pl.BlockSpec((1, 1, kt), lambda b, k: (b, 0, k)),      # bg truth
        ],
        out_specs=pl.BlockSpec((1, 1, 8), lambda b, k: (b, 0, 0)),
        scratch_shapes=[
            pltpu.VMEM((m_pad, 1), jnp.float32),   # running logsumexp max
            pltpu.VMEM((m_pad, 1), jnp.float32),   # running sum of exp
            pltpu.VMEM((1, 1), jnp.float32),       # sum(prob)
            pltpu.VMEM((1, 1), jnp.float32),       # sum(prob - prob^2)
            pltpu.VMEM((1, 1), jnp.float32),       # bg SSE
        ],
    )

    parts = pl.pallas_call(
        kernel,
        out_shape=jax.ShapeDtypeStruct((B, 1, 8), jnp.float32),
        grid_spec=grid_spec,
        compiler_params=pltpu.CompilerParams(
            dimension_semantics=("parallel", "arbitrary")),
    )(out_flat, emt, bgt)

    gmm_l = jnp.sum(parts[:, 0, 0])
    c_l = jnp.sum(parts[:, 0, 1]) / 100.0
    bg_l = jnp.sum(parts[:, 0, 2]) / float(B * K) * 10.0   # MSELoss mean, then *10
    if seperate:
        return jnp.stack([gmm_l, c_l, bg_l])
    return gmm_l + c_l + bg_l


# ------------------------- pure-JAX reference (for checking) -------------------------
def gmm_loss_ref(output, pos, mask, bg_truth):
    B, C, H, W = output.shape
    gi, gj = jnp.meshgrid(jnp.arange(H, dtype=jnp.float32) + 0.5,
                          jnp.arange(W, dtype=jnp.float32) + 0.5, indexing="ij")
    grid = jnp.stack([gi, gj], 0)[None]
    prob = output[:, 0]
    p_xy = jnp.transpose(output[:, 1:3] + grid, (0, 2, 3, 1)).reshape(B, -1, 2)
    p_sig = jnp.transpose(output[:, 3:5], (0, 2, 3, 1)).reshape(B, -1, 2)
    bg = output[:, 5]
    prob_f = prob.reshape(B, -1)
    p_mean = prob_f.sum(-1)
    p_var = (prob_f - prob_f ** 2).sum(-1)
    n = mask.sum(-1)
    logp_n = (-0.5 * ((n - p_mean) / jnp.sqrt(p_var)) ** 2
              - jnp.log(jnp.sqrt(p_var)) - 0.5 * _LOG_2PI)
    c_loss = jnp.sum(-logp_n * n) / 100.0
    log_w = jnp.log(prob_f) - jnp.log(p_mean)[:, None]
    truth = pos.reshape(B, -1, 3)[:, :, 0:2]
    z = (truth[:, :, None, :] - p_xy[:, None, :, :]) / p_sig[:, None, :, :]
    comp_lp = jnp.sum(-0.5 * z ** 2 - jnp.log(p_sig[:, None, :, :]) - 0.5 * _LOG_2PI, -1)
    lse = jax.nn.logsumexp(comp_lp + log_w[:, None, :], axis=-1)
    gmm_l = jnp.sum(-lse * mask)
    bg_l = jnp.mean((bg - bg_truth) ** 2) * 10.0
    return gmm_l + c_loss + bg_l


if __name__ == "__main__":
    def make_inputs(key, B, H, W, M):
        k1, k2, k3, k4 = jax.random.split(key, 4)
        raw = jax.random.normal(k1, (B, 8, H, W), dtype=jnp.float32)
        # make probability map and sigmas valid (positive), as a trained net would
        out = raw.at[:, 0].set(jax.nn.sigmoid(raw[:, 0]) * 0.1)
        out = out.at[:, 3:5].set(jax.nn.softplus(raw[:, 3:5]) + 0.3)
        pos = jax.random.uniform(k2, (B, M, 3), minval=0.0, maxval=float(H),
                                 dtype=jnp.float32)
        mask = (jax.random.uniform(k3, (B, M)) > 0.3).astype(jnp.float32)
        bgt = jax.random.normal(k4, (B, H, W), dtype=jnp.float32)
        return out, pos, mask, bgt

    key = jax.random.PRNGKey(0)
    k_a, k_b = jax.random.split(key)

    # 1) K = 256 (multiple of 128) -> single clean tile, no masking code emitted.
    out1, pos1, msk1, bgt1 = make_inputs(k_a, B=2, H=16, W=16, M=8)
    loss1 = jax.block_until_ready(gmm_loss(out1, pos1, msk1, bgt1))
    ref1 = gmm_loss_ref(out1, pos1, msk1, bgt1)
    assert jnp.isfinite(loss1), "loss1 is not finite"
    assert jnp.allclose(loss1, ref1, rtol=2e-3, atol=1e-2), (loss1, ref1)

    # 2) K = 400 with a forced 128-lane tile -> exercises the ragged last-tile path
    #    (no wrapper pad; garbage lanes handled by in-kernel NaN-safe masking).
    out2, pos2, msk2, bgt2 = make_inputs(k_b, B=2, H=20, W=20, M=8)
    loss2 = jax.block_until_ready(gmm_loss(out2, pos2, msk2, bgt2, k_tile=128))
    ref2 = gmm_loss_ref(out2, pos2, msk2, bgt2)
    assert jnp.isfinite(loss2), "loss2 is not finite"
    assert jnp.allclose(loss2, ref2, rtol=2e-3, atol=1e-2), (loss2, ref2)

    # seperate=True path
    parts = jax.block_until_ready(gmm_loss(out1, pos1, msk1, bgt1, seperate=True))
    assert parts.shape == (3,) and bool(jnp.isfinite(parts).all())

    print("KERNEL_OK")
</pallas_src>

<mosaic_0001>
module attributes {stable_mosaic.version = 11 : i64} {
  func.func @_gmm_loss_kernel(%arg0: i32, %arg1: i32, %arg2: memref<1x8x256xf32, #tpu.memory_space<vmem>>, %arg3: memref<1x8x3xf32, #tpu.memory_space<vmem>>, %arg4: memref<1x1x256xf32, #tpu.memory_space<vmem>>, %arg5: memref<1x1x8xf32, #tpu.memory_space<vmem>>, %arg6: memref<8x1xf32, #tpu.memory_space<vmem>>, %arg7: memref<8x1xf32, #tpu.memory_space<vmem>>, %arg8: memref<1x1xf32, #tpu.memory_space<vmem>>, %arg9: memref<1x1xf32, #tpu.memory_space<vmem>>, %arg10: memref<1x1xf32, #tpu.memory_space<vmem>>) attributes {dimension_semantics = [#tpu.dimension_semantics<parallel>, #tpu.dimension_semantics<arbitrary>], iteration_bounds = array<i64: 2, 1>, scalar_prefetch = 0 : i64, scratch_operands = 5 : i64, tpu.core_type = #tpu.core_type<tc>, window_params = [{transform_indices = @transform_0, window_bounds = array<i64: 1, 8, 256>}, {transform_indices = @transform_1, window_bounds = array<i64: 1, 8, 3>}, {transform_indices = @transform_2, window_bounds = array<i64: 1, 1, 256>}, {transform_indices = @transform_3, window_bounds = array<i64: 1, 1, 8>}]} {
    %c0_i32 = arith.constant 0 : i32
    %0 = arith.cmpi eq, %arg1, %c0_i32 : i32
    %1 = arith.extui %0 : i1 to i32
    %c0_i32_0 = arith.constant 0 : i32
    %2 = arith.cmpi ne, %1, %c0_i32_0 : i32
    scf.if %2 {
      %cst_58 = arith.constant 0xFF800000 : f32
      %117 = vector.broadcast %cst_58 : f32 to vector<8x1xf32>
      %c0_59 = arith.constant 0 : index
      %c0_60 = arith.constant 0 : index
      %118 = vector.load %arg6[%c0_59, %c0_60] : memref<8x1xf32, #tpu.memory_space<vmem>>, vector<8x1xf32>
      tpu.vector_store %arg6[%c0_59, %c0_60], %117 {strides = array<i32>} : memref<8x1xf32, #tpu.memory_space<vmem>>, vector<8x1xf32>,
      %cst_61 = arith.constant 0.000000e+00 : f32
      %119 = vector.broadcast %cst_61 : f32 to vector<8x1xf32>
      %c0_62 = arith.constant 0 : index
      %c0_63 = arith.constant 0 : index
      %120 = vector.load %arg7[%c0_62, %c0_63] : memref<8x1xf32, #tpu.memory_space<vmem>>, vector<8x1xf32>
      tpu.vector_store %arg7[%c0_62, %c0_63], %119 {strides = array<i32>} : memref<8x1xf32, #tpu.memory_space<vmem>>, vector<8x1xf32>,
      %cst_64 = arith.constant 0.000000e+00 : f32
      %121 = vector.broadcast %cst_64 : f32 to vector<1x1xf32>
      %c0_65 = arith.constant 0 : index
      %c0_66 = arith.constant 0 : index
      %122 = vector.load %arg8[%c0_65, %c0_66] : memref<1x1xf32, #tpu.memory_space<vmem>>, vector<1x1xf32>
      tpu.vector_store %arg8[%c0_65, %c0_66], %121 {strides = array<i32>} : memref<1x1xf32, #tpu.memory_space<vmem>>, vector<1x1xf32>,
      %cst_67 = arith.constant 0.000000e+00 : f32
      %123 = vector.broadcast %cst_67 : f32 to vector<1x1xf32>
      %c0_68 = arith.constant 0 : index
      %c0_69 = arith.constant 0 : index
      %124 = vector.load %arg9[%c0_68, %c0_69] : memref<1x1xf32, #tpu.memory_space<vmem>>, vector<1x1xf32>
      tpu.vector_store %arg9[%c0_68, %c0_69], %123 {strides = array<i32>} : memref<1x1xf32, #tpu.memory_space<vmem>>, vector<1x1xf32>,
      %cst_70 = arith.constant 0.000000e+00 : f32
      %125 = vector.broadcast %cst_70 : f32 to vector<1x1xf32>
      %c0_71 = arith.constant 0 : index
      %c0_72 = arith.constant 0 : index
      %126 = vector.load %arg10[%c0_71, %c0_72] : memref<1x1xf32, #tpu.memory_space<vmem>>, vector<1x1xf32>
      tpu.vector_store %arg10[%c0_71, %c0_72], %125 {strides = array<i32>} : memref<1x1xf32, #tpu.memory_space<vmem>>, vector<1x1xf32>,
    } else {
    }
    %c0 = arith.constant 0 : index
    %c0_1 = arith.constant 0 : index
    %c0_2 = arith.constant 0 : index
    %3 = vector.load %arg2[%c0, %c0_1, %c0_2] : memref<1x8x256xf32, #tpu.memory_space<vmem>>, vector<1x1x256xf32>
    %4 = vector.shape_cast %3 : vector<1x1x256xf32> to vector<1x256xf32>
    %c0_3 = arith.constant 0 : index
    %c1 = arith.constant 1 : index
    %c0_4 = arith.constant 0 : index
    %5 = vector.load %arg2[%c0_3, %c1, %c0_4] : memref<1x8x256xf32, #tpu.memory_space<vmem>>, vector<1x1x256xf32>
    %6 = vector.shape_cast %5 : vector<1x1x256xf32> to vector<1x256xf32>
    %c0_5 = arith.constant 0 : index
    %c2 = arith.constant 2 : index
    %c0_6 = arith.constant 0 : index
    %7 = vector.load %arg2[%c0_5, %c2, %c0_6] : memref<1x8x256xf32, #tpu.memory_space<vmem>>, vector<1x1x256xf32>
    %8 = vector.shape_cast %7 : vector<1x1x256xf32> to vector<1x256xf32>
    %c0_7 = arith.constant 0 : index
    %c3 = arith.constant 3 : index
    %c0_8 = arith.constant 0 : index
    %9 = vector.load %arg2[%c0_7, %c3, %c0_8] : memref<1x8x256xf32, #tpu.memory_space<vmem>>, vector<1x1x256xf32>
    %10 = vector.shape_cast %9 : vector<1x1x256xf32> to vector<1x256xf32>
    %c0_9 = arith.constant 0 : index
    %c4 = arith.constant 4 : index
    %c0_10 = arith.constant 0 : index
    %11 = vector.load %arg2[%c0_9, %c4, %c0_10] : memref<1x8x256xf32, #tpu.memory_space<vmem>>, vector<1x1x256xf32>
    %12 = vector.shape_cast %11 : vector<1x1x256xf32> to vector<1x256xf32>
    %c0_11 = arith.constant 0 : index
    %c5 = arith.constant 5 : index
    %c0_12 = arith.constant 0 : index
    %13 = vector.load %arg2[%c0_11, %c5, %c0_12] : memref<1x8x256xf32, #tpu.memory_space<vmem>>, vector<1x1x256xf32>
    %14 = vector.shape_cast %13 : vector<1x1x256xf32> to vector<1x256xf32>
    %c0_13 = arith.constant 0 : index
    %c0_14 = arith.constant 0 : index
    %c0_15 = arith.constant 0 : index
    %15 = vector.load %arg4[%c0_13, %c0_14, %c0_15] : memref<1x1x256xf32, #tpu.memory_space<vmem>>, vector<1x1x256xf32>
    %16 = vector.shape_cast %15 : vector<1x1x256xf32> to vector<1x256xf32>
    %17 = arith.subf %14, %16 : vector<1x256xf32>
    %c256_i32 = arith.constant 256 : i32
    %18 = arith.muli %arg1, %c256_i32 : i32
    %19 = tpu.iota {dimensions = array<i32: 1>} : vector<1x256xi32>
    %20 = vector.broadcast %18 : i32 to vector<1x256xi32>
    %21 = arith.addi %20, %19 : vector<1x256xi32>
    %c0_16 = arith.constant 0 : index
    %c0_17 = arith.constant 0 : index
    %22 = vector.load %arg8[%c0_16, %c0_17] : memref<1x1xf32, #tpu.memory_space<vmem>>, vector<1x1xf32>
    %23 = vector.shape_cast %4 : vector<1x256xf32> to vector<1x1x256xf32>
    %cst = arith.constant dense<0.000000e+00> : vector<1xf32>
    %24 = vector.multi_reduction <add>, %23, %cst [1, 2] : vector<1x1x256xf32> to vector<1xf32>
    %25 = vector.shape_cast %24 : vector<1xf32> to vector<1x1x1xf32>
    %26 = vector.extract %25[0, 0, 0] : f32 from vector<1x1x1xf32>
    %27 = vector.broadcast %26 : f32 to vector<1x1xf32>
    %28 = arith.addf %22, %27 : vector<1x1xf32>
    %c0_18 = arith.constant 0 : index
    %c0_19 = arith.constant 0 : index
    %29 = vector.load %arg8[%c0_18, %c0_19] : memref<1x1xf32, #tpu.memory_space<vmem>>, vector<1x1xf32>
    tpu.vector_store %arg8[%c0_18, %c0_19], %28 {strides = array<i32>} : memref<1x1xf32, #tpu.memory_space<vmem>>, vector<1x1xf32>,
    %c0_20 = arith.constant 0 : index
    %c0_21 = arith.constant 0 : index
    %30 = vector.load %arg9[%c0_20, %c0_21] : memref<1x1xf32, #tpu.memory_space<vmem>>, vector<1x1xf32>
    %31 = arith.mulf %4, %4 : vector<1x256xf32>
    %32 = arith.subf %4, %31 : vector<1x256xf32>
    %33 = vector.shape_cast %32 : vector<1x256xf32> to vector<1x1x256xf32>
    %cst_22 = arith.constant dense<0.000000e+00> : vector<1xf32>
    %34 = vector.multi_reduction <add>, %33, %cst_22 [1, 2] : vector<1x1x256xf32> to vector<1xf32>
    %35 = vector.shape_cast %34 : vector<1xf32> to vector<1x1x1xf32>
    %36 = vector.extract %35[0, 0, 0] : f32 from vector<1x1x1xf32>
    %37 = vector.broadcast %36 : f32 to vector<1x1xf32>
    %38 = arith.addf %30, %37 : vector<1x1xf32>
    %c0_23 = arith.constant 0 : index
    %c0_24 = arith.constant 0 : index
    %39 = vector.load %arg9[%c0_23, %c0_24] : memref<1x1xf32, #tpu.memory_space<vmem>>, vector<1x1xf32>
    tpu.vector_store %arg9[%c0_23, %c0_24], %38 {strides = array<i32>} : memref<1x1xf32, #tpu.memory_space<vmem>>, vector<1x1xf32>,
    %c0_25 = arith.constant 0 : index
    %c0_26 = arith.constant 0 : index
    %40 = vector.load %arg10[%c0_25, %c0_26] : memref<1x1xf32, #tpu.memory_space<vmem>>, vector<1x1xf32>
    %41 = arith.mulf %17, %17 : vector<1x256xf32>
    %42 = vector.shape_cast %41 : vector<1x256xf32> to vector<1x1x256xf32>
    %cst_27 = arith.constant dense<0.000000e+00> : vector<1xf32>
    %43 = vector.multi_reduction <add>, %42, %cst_27 [1, 2] : vector<1x1x256xf32> to vector<1xf32>
    %44 = vector.shape_cast %43 : vector<1xf32> to vector<1x1x1xf32>
    %45 = vector.extract %44[0, 0, 0] : f32 from vector<1x1x1xf32>
    %46 = vector.broadcast %45 : f32 to vector<1x1xf32>
    %47 = arith.addf %40, %46 : vector<1x1xf32>
    %c0_28 = arith.constant 0 : index
    %c0_29 = arith.constant 0 : index
    %48 = vector.load %arg10[%c0_28, %c0_29] : memref<1x1xf32, #tpu.memory_space<vmem>>, vector<1x1xf32>
    tpu.vector_store %arg10[%c0_28, %c0_29], %47 {strides = array<i32>} : memref<1x1xf32, #tpu.memory_space<vmem>>, vector<1x1xf32>,
    %49 = arith.sitofp %21 : vector<1x256xi32> to vector<1x256xf32>
    %cst_30 = arith.constant 5.000000e-01 : f32
    %50 = vector.broadcast %cst_30 : f32 to vector<1x256xf32>
    %51 = arith.addf %49, %50 : vector<1x256xf32>
    %cst_31 = arith.constant 6.250000e-02 : f32
    %52 = vector.broadcast %cst_31 : f32 to vector<1x256xf32>
    %53 = arith.mulf %51, %52 : vector<1x256xf32>
    %54 = math.floor %53 : vector<1x256xf32>
    %cst_32 = arith.constant 1.600000e+01 : f32
    %55 = vector.broadcast %cst_32 : f32 to vector<1x256xf32>
    %56 = arith.mulf %54, %55 : vector<1x256xf32>
    %57 = arith.subf %49, %56 : vector<1x256xf32>
    %cst_33 = arith.constant 5.000000e-01 : f32
    %58 = vector.broadcast %cst_33 : f32 to vector<1x256xf32>
    %59 = arith.addf %54, %58 : vector<1x256xf32>
    %60 = arith.addf %6, %59 : vector<1x256xf32>
    %cst_34 = arith.constant 5.000000e-01 : f32
    %61 = vector.broadcast %cst_34 : f32 to vector<1x256xf32>
    %62 = arith.addf %57, %61 : vector<1x256xf32>
    %63 = arith.addf %8, %62 : vector<1x256xf32>
    %64 = tpu.reciprocal %10 {approx = true} : vector<1x256xf32> -> vector<1x256xf32>
    %65 = tpu.reciprocal %12 {approx = true} : vector<1x256xf32> -> vector<1x256xf32>
    %66 = arith.mulf %4, %64 : vector<1x256xf32>
    %67 = arith.mulf %66, %65 : vector<1x256xf32>
    %68 = math.log %67 : vector<1x256xf32>
    %cst_35 = arith.constant 1.83787704 : f32
    %69 = vector.broadcast %cst_35 : f32 to vector<1x256xf32>
    %70 = arith.subf %68, %69 : vector<1x256xf32>
    %cst_36 = arith.constant 0.707106769 : f32
    %71 = vector.broadcast %cst_36 : f32 to vector<1x256xf32>
    %72 = arith.mulf %64, %71 : vector<1x256xf32>
    %cst_37 = arith.constant 0.707106769 : f32
    %73 = vector.broadcast %cst_37 : f32 to vector<1x256xf32>
    %74 = arith.mulf %65, %73 : vector<1x256xf32>
    %c0_38 = arith.constant 0 : index
    %c0_39 = arith.constant 0 : index
    %c0_40 = arith.constant 0 : index
    %75 = vector.load %arg3[%c0_38, %c0_39, %c0_40] : memref<1x8x3xf32, #tpu.memory_space<vmem>>, vector<1x8x1xf32>
    %76 = vector.shape_cast %75 : vector<1x8x1xf32> to vector<8x1xf32>
    %c0_41 = arith.constant 0 : index
    %c0_42 = arith.constant 0 : index
    %c1_43 = arith.constant 1 : index
    %77 = vector.load %arg3[%c0_41, %c0_42, %c1_43] : memref<1x8x3xf32, #tpu.memory_space<vmem>>, vector<1x8x1xf32>
    %78 = vector.shape_cast %77 : vector<1x8x1xf32> to vector<8x1xf32>
    %79 = vector.broadcast %76 : vector<8x1xf32> to vector<8x256xf32>
    %80 = vector.broadcast %60 : vector<1x256xf32> to vector<8x256xf32>
    %81 = arith.subf %79, %80 : vector<8x256xf32>
    %82 = vector.broadcast %72 : vector<1x256xf32> to vector<8x256xf32>
    %83 = arith.mulf %81, %82 : vector<8x256xf32>
    %84 = vector.broadcast %78 : vector<8x1xf32> to vector<8x256xf32>
    %85 = vector.broadcast %63 : vector<1x256xf32> to vector<8x256xf32>
    %86 = arith.subf %84, %85 : vector<8x256xf32>
    %87 = vector.broadcast %74 : vector<1x256xf32> to vector<8x256xf32>
    %88 = arith.mulf %86, %87 : vector<8x256xf32>
    %89 = arith.mulf %83, %83 : vector<8x256xf32>
    %90 = vector.broadcast %70 : vector<1x256xf32> to vector<8x256xf32>
    %91 = arith.subf %90, %89 : vector<8x256xf32>
    %92 = arith.mulf %88, %88 : vector<8x256xf32>
    %93 = arith.subf %91, %92 : vector<8x256xf32>
    %c0_44 = arith.constant 0 : index
    %c0_45 = arith.constant 0 : index
    %94 = vector.load %arg6[%c0_44, %c0_45] : memref<8x1xf32, #tpu.memory_space<vmem>>, vector<8x1xf32>
    %cst_46 = arith.constant dense<0xFF800000> : vector<8xf32>
    %95 = vector.multi_reduction <maximumf>, %93, %cst_46 [1] : vector<8x256xf32> to vector<8xf32>
    %96 = vector.shape_cast %95 : vector<8xf32> to vector<8x1xf32>
    %97 = arith.maximumf %94, %96 : vector<8x1xf32>
    %cst_47 = arith.constant 0xFF800000 : f32
    %98 = vector.broadcast %cst_47 : f32 to vector<8x1xf32>
    %99 = arith.cmpf oeq, %97, %98 : vector<8x1xf32>
    %cst_48 = arith.constant 0.000000e+00 : f32
    %100 = vector.broadcast %cst_48 : f32 to vector<8x1xf32>
    %101 = arith.select %99, %100, %97 : vector<8x1xi1>, vector<8x1xf32>
    %c0_49 = arith.constant 0 : index
    %c0_50 = arith.constant 0 : index
    %102 = vector.load %arg7[%c0_49, %c0_50] : memref<8x1xf32, #tpu.memory_space<vmem>>, vector<8x1xf32>
    %103 = arith.subf %94, %101 : vector<8x1xf32>
    %104 = math.exp %103 : vector<8x1xf32>
    %105 = arith.mulf %102, %104 : vector<8x1xf32>
    %106 = vector.broadcast %101 : vector<8x1xf32> to vector<8x256xf32>
    %107 = arith.subf %93, %106 : vector<8x256xf32>
    %108 = math.exp %107 : vector<8x256xf32>
    %cst_51 = arith.constant dense<0.000000e+00> : vector<8xf32>
    %109 = vector.multi_reduction <add>, %108, %cst_51 [1] : vector<8x256xf32> to vector<8xf32>
    %110 = vector.shape_cast %109 : vector<8xf32> to vector<8x1xf32>
    %111 = arith.addf %105, %110 : vector<8x1xf32>
    %c0_52 = arith.constant 0 : index
    %c0_53 = arith.constant 0 : index
    %112 = vector.load %arg7[%c0_52, %c0_53] : memref<8x1xf32, #tpu.memory_space<vmem>>, vector<8x1xf32>
    tpu.vector_store %arg7[%c0_52, %c0_53], %111 {strides = array<i32>} : memref<8x1xf32, #tpu.memory_space<vmem>>, vector<8x1xf32>,
    %c0_54 = arith.constant 0 : index
    %c0_55 = arith.constant 0 : index
    %113 = vector.load %arg6[%c0_54, %c0_55] : memref<8x1xf32, #tpu.memory_space<vmem>>, vector<8x1xf32>
    tpu.vector_store %arg6[%c0_54, %c0_55], %97 {strides = array<i32>} : memref<8x1xf32, #tpu.memory_space<vmem>>, vector<8x1xf32>,
    %c0_i32_56 = arith.constant 0 : i32
    %114 = arith.cmpi eq, %arg1, %c0_i32_56 : i32
    %115 = arith.extui %114 : i1 to i32
    %c0_i32_57 = arith.constant 0 : i32
    %116 = arith.cmpi ne, %115, %c0_i32_57 : i32
    scf.if %116 {
      %c0_58 = arith.constant 0 : index
      %c0_59 = arith.constant 0 : index
      %c2_60 = arith.constant 2 : index
      %117 = vector.load %arg3[%c0_58, %c0_59, %c2_60] : memref<1x8x3xf32, #tpu.memory_space<vmem>>, vector<1x8x1xf32>
      %118 = vector.shape_cast %117 : vector<1x8x1xf32> to vector<8x1xf32>
      %c0_61 = arith.constant 0 : index
      %c0_62 = arith.constant 0 : index
      %119 = vector.load %arg8[%c0_61, %c0_62] : memref<1x1xf32, #tpu.memory_space<vmem>>, vector<1x1xf32>
      %c0_63 = arith.constant 0 : index
      %c0_64 = arith.constant 0 : index
      %120 = vector.load %arg6[%c0_63, %c0_64] : memref<8x1xf32, #tpu.memory_space<vmem>>, vector<8x1xf32>
      %c0_65 = arith.constant 0 : index
      %c0_66 = arith.constant 0 : index
      %121 = vector.load %arg7[%c0_65, %c0_66] : memref<8x1xf32, #tpu.memory_space<vmem>>, vector<8x1xf32>
      %122 = math.log %121 : vector<8x1xf32>
      %123 = arith.addf %120, %122 : vector<8x1xf32>
      %124 = math.log %119 : vector<1x1xf32>
      %125 = vector.broadcast %124 : vector<1x1xf32> to vector<8x1xf32>
      %126 = arith.subf %123, %125 : vector<8x1xf32>
      %cst_67 = arith.constant 0.000000e+00 : f32
      %127 = vector.broadcast %cst_67 : f32 to vector<8x1xf32>
      %128 = arith.subf %127, %126 : vector<8x1xf32>
      %129 = arith.mulf %128, %118 : vector<8x1xf32>
      %130 = vector.shape_cast %129 : vector<8x1xf32> to vector<1x8x1xf32>
      %cst_68 = arith.constant dense<0.000000e+00> : vector<1xf32>
      %131 = vector.multi_reduction <add>, %130, %cst_68 [1, 2] : vector<1x8x1xf32> to vector<1xf32>
      %132 = vector.shape_cast %131 : vector<1xf32> to vector<1x1x1xf32>
      %133 = vector.extract %132[0, 0, 0] : f32 from vector<1x1x1xf32>
      %134 = vector.broadcast %133 : f32 to vector<1x1xf32>
      %135 = vector.shape_cast %118 : vector<8x1xf32> to vector<1x8x1xf32>
      %cst_69 = arith.constant dense<0.000000e+00> : vector<1xf32>
      %136 = vector.multi_reduction <add>, %135, %cst_69 [1, 2] : vector<1x8x1xf32> to vector<1xf32>
      %137 = vector.shape_cast %136 : vector<1xf32> to vector<1x1x1xf32>
      %138 = vector.extract %137[0, 0, 0] : f32 from vector<1x1x1xf32>
      %139 = vector.broadcast %138 : f32 to vector<1x1xf32>
      %c0_70 = arith.constant 0 : index
      %c0_71 = arith.constant 0 : index
      %140 = vector.load %arg9[%c0_70, %c0_71] : memref<1x1xf32, #tpu.memory_space<vmem>>, vector<1x1xf32>
      %141 = math.sqrt %140 : vector<1x1xf32>
      %142 = arith.subf %139, %119 : vector<1x1xf32>
      %143 = arith.divf %142, %141 : vector<1x1xf32>
      %144 = arith.mulf %143, %143 : vector<1x1xf32>
      %cst_72 = arith.constant -5.000000e-01 : f32
      %145 = vector.broadcast %cst_72 : f32 to vector<1x1xf32>
      %146 = arith.mulf %145, %144 : vector<1x1xf32>
      %147 = math.log %141 : vector<1x1xf32>
      %148 = arith.subf %146, %147 : vector<1x1xf32>
      %cst_73 = arith.constant 0.918938517 : f32
      %149 = vector.broadcast %cst_73 : f32 to vector<1x1xf32>
      %150 = arith.subf %148, %149 : vector<1x1xf32>
      %cst_74 = arith.constant 0.000000e+00 : f32
      %151 = vector.broadcast %cst_74 : f32 to vector<1x1xf32>
      %152 = arith.subf %151, %150 : vector<1x1xf32>
      %153 = arith.mulf %152, %139 : vector<1x1xf32>
      %154 = tpu.iota {dimensions = array<i32: 1>} : vector<1x8xi32>
      %c0_i32_75 = arith.constant 0 : i32
      %155 = vector.broadcast %c0_i32_75 : i32 to vector<1x8xi32>
      %156 = arith.cmpi eq, %154, %155 : vector<1x8xi32>
      %cst_76 = arith.constant 0.000000e+00 : f32
      %157 = vector.shape_cast %134 : vector<1x1xf32> to vector<1x1xf32>
      %158 = vector.broadcast %157 : vector<1x1xf32> to vector<1x8xf32>
      %159 = vector.broadcast %cst_76 : f32 to vector<1x8xf32>
      %160 = arith.select %156, %158, %159 : vector<1x8xi1>, vector<1x8xf32>
      %c1_i32 = arith.constant 1 : i32
      %161 = vector.broadcast %c1_i32 : i32 to vector<1x8xi32>
      %162 = arith.cmpi eq, %154, %161 : vector<1x8xi32>
      %cst_77 = arith.constant 0.000000e+00 : f32
      %163 = vector.shape_cast %153 : vector<1x1xf32> to vector<1x1xf32>
      %164 = vector.broadcast %163 : vector<1x1xf32> to vector<1x8xf32>
      %165 = vector.broadcast %cst_77 : f32 to vector<1x8xf32>
      %166 = arith.select %162, %164, %165 : vector<1x8xi1>, vector<1x8xf32>
      %167 = arith.addf %160, %166 : vector<1x8xf32>
      %c2_i32 = arith.constant 2 : i32
      %168 = vector.broadcast %c2_i32 : i32 to vector<1x8xi32>
      %169 = arith.cmpi eq, %154, %168 : vector<1x8xi32>
      %c0_78 = arith.constant 0 : index
      %c0_79 = arith.constant 0 : index
      %170 = vector.load %arg10[%c0_78, %c0_79] : memref<1x1xf32, #tpu.memory_space<vmem>>, vector<1x1xf32>
      %cst_80 = arith.constant 0.000000e+00 : f32
      %171 = vector.shape_cast %170 : vector<1x1xf32> to vector<1x1xf32>
      %172 = vector.broadcast %171 : vector<1x1xf32> to vector<1x8xf32>
      %173 = vector.broadcast %cst_80 : f32 to vector<1x8xf32>
      %174 = arith.select %169, %172, %173 : vector<1x8xi1>, vector<1x8xf32>
      %175 = arith.addf %167, %174 : vector<1x8xf32>
      %c0_81 = arith.constant 0 : index
      %c0_82 = arith.constant 0 : index
      %c0_83 = arith.constant 0 : index
      %176 = vector.load %arg5[%c0_81, %c0_82, %c0_83] : memref<1x1x8xf32, #tpu.memory_space<vmem>>, vector<1x1x8xf32>
      %177 = vector.shape_cast %176 : vector<1x1x8xf32> to vector<1x8xf32>
      %178 = vector.shape_cast %175 : vector<1x8xf32> to vector<1x1x8xf32>
      tpu.vector_store %arg5[%c0_81, %c0_82, %c0_83], %178 {strides = array<i32>} : memref<1x1x8xf32, #tpu.memory_space<vmem>>, vector<1x1x8xf32>,
    } else {
    }
    return
  }
  func.func @transform_0(%arg0: i32, %arg1: i32) -> (i32, i32, i32) {
    %c0_i32 = arith.constant 0 : i32
    %c0_i32_0 = arith.constant 0 : i32
    return %arg0, %c0_i32, %arg1 : i32, i32, i32
  }
  func.func @transform_1(%arg0: i32, %arg1: i32) -> (i32, i32, i32) {
    %c0_i32 = arith.constant 0 : i32
    %c0_i32_0 = arith.constant 0 : i32
    %c0_i32_1 = arith.constant 0 : i32
    return %arg0, %c0_i32, %c0_i32_0 : i32, i32, i32
  }
  func.func @transform_2(%arg0: i32, %arg1: i32) -> (i32, i32, i32) {
    %c0_i32 = arith.constant 0 : i32
    %c0_i32_0 = arith.constant 0 : i32
    return %arg0, %c0_i32, %arg1 : i32, i32, i32
  }
  func.func @transform_3(%arg0: i32, %arg1: i32) -> (i32, i32, i32) {
    %c0_i32 = arith.constant 0 : i32
    %c0_i32_0 = arith.constant 0 : i32
    %c0_i32_1 = arith.constant 0 : i32
    return %arg0, %c0_i32, %c0_i32_0 : i32, i32, i32
  }
}

</mosaic_0001>

<llo_original>
// kernel: tpu_custom_call.1
$region0: #{tpu_custom_call.1}
  #allocation0 [shape = 'u32[]', space=smem, size = 0x4, offset = 0x4, fixed_abs, tag = 'smem constant byte address 0x4 - core index']
  #allocation1 [shape = 'u32[144,128]{1,0:T(1,128)}', space=vmem, size = 0x12000, scoped, tag = 'internal scratch']
  #allocation2 [shape = 'f32[8,1]{1,0:T(8,128)}', space=vmem, size = 0x1000, scoped, tag = 'scratch operand']
  #allocation3 [shape = 'f32[8,1]{1,0:T(8,128)}', space=vmem, size = 0x1000, scoped, tag = 'scratch operand']
  #allocation4 [shape = 'f32[1,1]{1,0:T(1,128)}', space=vmem, size = 0x200, scoped, tag = 'scratch operand']
  #allocation5 [shape = 'f32[1,1]{1,0:T(1,128)}', space=vmem, size = 0x200, scoped, tag = 'scratch operand']
  #allocation6 [shape = 'f32[1,1]{1,0:T(1,128)}', space=vmem, size = 0x200, scoped, tag = 'scratch operand']
  %s0 = inlined_call_operand.hbm [shape: f32[2,8,256], index: 0, kind: input, shape index: {}]
  %s1 = inlined_call_operand.vmem [shape: f32[2,8,3], index: 1, kind: input, shape index: {}]
  %s2 = inlined_call_operand.vmem [shape: f32[2,1,256], index: 2, kind: input, shape index: {}]
  %s3 = inlined_call_operand.hbm [shape: f32[2,1,8], index: 3, kind: output, shape index: {}]
  %s4 = sld [smem:[#allocation0]]
  $region57: #{tpu_custom_call.1} parent=0
    _
  %s6 = ssub.s32 1, %s4
  %s7 = scalar_select 0, %s6, %s4
  $region1: #{tpu_custom_call.1} parent=0
    #allocation7 [shape = 'u8[16384]{0}', space=vmem, size = 0x4000, scoped, tag = 'input window, operand 0']
    #allocation8 [shape = 's32[2]{0}', space=sflag, size = 0x8, scoped, tag = 'scoped memory for tpu_custom_call.1']
    #allocation9 [shape = 's32[2]{0}', space=sflag, size = 0x8, scoped, tag = 'scoped memory for tpu_custom_call.1']
    #allocation10 [shape = 'u8[1024]{0}', space=vmem, size = 0x400, scoped, tag = 'output window, operand 0']
    %8 = vsyncpa [#allocation8], 0
    %s9 = scalar_lea.sflag [#allocation8], 1
    %10 = vsyncpa %s9, 0
    %11 = vsyncpa [#allocation9], 0
    %s12 = scalar_lea.sflag [#allocation9], 1
    %13 = vsyncpa %s12, 0
    loop: start=0, step=1, limit=4
    $region2: #{tpu_custom_call.1} parent=1 // loop_pre_header
      _
    $region3: #{tpu_custom_call.1} parent=1 // loop_header
      %s15 = sphi 0, %s19
      %p16 = scmp.ge.s32.totalorder %s15, 4
      %s22 = sphi 0, %s34
      %s23 = sphi 0, %s30
      %s24 = sphi 0, %s22
      %s25 = sphi 0, %s23
      %s26 = sphi 0, %s24
      %s27 = sphi 0, %s25
      %s39 = sphi 0, %s41
      %s42 = sphi 0, %s39
      %s43 = sphi 0, %s42
      %s59 = sphi 0, %s43
      %s65 = sphi 0, %s67
      %s68 = sphi 0, %s65
      %s69 = sphi 0, %s68
      %s85 = sphi 0, %s69
      %s93 = sphi 0, %s95
      %s96 = sphi 0, %s93
      %s97 = sphi 0, %s96
      %s113 = sphi 0, %s97
      %s119 = sphi 0, %s121
      %s122 = sphi 0, %s119
      %s123 = sphi 0, %s122
      %s139 = sphi 0, %s123
    $region4: #{tpu_custom_call.1} parent=1 // loop_header_branch
      %18 = sbr.rel (%p16) target = $region8
    $region5: #{tpu_custom_call.1} parent=1 // loop_body
      %s20 = ssub.s32 %s15, 1
      %s21 = ssub.s32 %s15, 2
      %s28 = sadd.s32 1, %s23
      %p29 = scmp.ge.s32.totalorder %s28, 1
      %s30 = scalar_select %p29, 0, %s28
      %s31 = sadd.s32 1, %s22
      %s32 = scalar_select %p29, %s31, %s22
      %p33 = scmp.ge.s32.totalorder %s32, 2
      %s34 = scalar_select %p33, 0, %s32
      %s35 = ssub.s32 %s22, %s34
      %s36 = ssub.s32 %s23, %s30
      %s37 = sor.u32 %s35, %s36
      %p38 = scmp.eq.s32.totalorder %s37, 0
      %s40 = sadd.s32 %s39, 1
      %s41 = scalar_select %p38, %s39, %s40
      %p44 = pneg %p38
      %p45 = scmp.eq.s32.totalorder %s15, 1
      %p46 = por %p44, %p45
      %p47 = scmp.ne.s32.totalorder %s39, %s42
      %p48 = scmp.eq.s32.totalorder %s15, 0
      %p49 = por %p47, %p48
      %p50 = scmp.ne.s32.totalorder %s39, %s42
      %p51 = scmp.eq.s32.totalorder %s20, 1
      %p52 = por %p50, %p51
      %p53 = scmp.ne.s32.totalorder %s42, %s43
      %p54 = scmp.eq.s32.totalorder %s20, 0
      %p55 = por %p53, %p54
      %p56 = scmp.ne.s32.totalorder %s42, %s43
      %p57 = scmp.eq.s32.totalorder %s21, 1
      %p58 = por %p56, %p57
      %p60 = scmp.ne.s32.totalorder %s43, %s59
      %p61 = scmp.eq.s32.totalorder %s21, 0
      %p62 = por %p60, %p61
      %s63 = ssub.s32 %s22, %s34
      %p64 = scmp.eq.s32.totalorder %s63, 0
      %s66 = sadd.s32 %s65, 1
      %s67 = scalar_select %p64, %s65, %s66
      %p70 = pneg %p64
      %p71 = scmp.eq.s32.totalorder %s15, 1
      %p72 = por %p70, %p71
      %p73 = scmp.ne.s32.totalorder %s65, %s68
      %p74 = scmp.eq.s32.totalorder %s15, 0
      %p75 = por %p73, %p74
      %p76 = scmp.ne.s32.totalorder %s65, %s68
      %p77 = scmp.eq.s32.totalorder %s20, 1
      %p78 = por %p76, %p77
      %p79 = scmp.ne.s32.totalorder %s68, %s69
      %p80 = scmp.eq.s32.totalorder %s20, 0
      %p81 = por %p79, %p80
      %p82 = scmp.ne.s32.totalorder %s68, %s69
      %p83 = scmp.eq.s32.totalorder %s21, 1
      %p84 = por %p82, %p83
      %p86 = scmp.ne.s32.totalorder %s69, %s85
      %p87 = scmp.eq.s32.totalorder %s21, 0
      %p88 = por %p86, %p87
      %s89 = ssub.s32 %s22, %s34
      %s90 = ssub.s32 %s23, %s30
      %s91 = sor.u32 %s89, %s90
      %p92 = scmp.eq.s32.totalorder %s91, 0
      %s94 = sadd.s32 %s93, 1
      %s95 = scalar_select %p92, %s93, %s94
      %p98 = pneg %p92
      %p99 = scmp.eq.s32.totalorder %s15, 1
      %p100 = por %p98, %p99
      %p101 = scmp.ne.s32.totalorder %s93, %s96
      %p102 = scmp.eq.s32.totalorder %s15, 0
      %p103 = por %p101, %p102
      %p104 = scmp.ne.s32.totalorder %s93, %s96
      %p105 = scmp.eq.s32.totalorder %s20, 1
      %p106 = por %p104, %p105
      %p107 = scmp.ne.s32.totalorder %s96, %s97
      %p108 = scmp.eq.s32.totalorder %s20, 0
      %p109 = por %p107, %p108
      %p110 = scmp.ne.s32.totalorder %s96, %s97
      %p111 = scmp.eq.s32.totalorder %s21, 1
      %p112 = por %p110, %p111
      %p114 = scmp.ne.s32.totalorder %s97, %s113
      %p115 = scmp.eq.s32.totalorder %s21, 0
      %p116 = por %p114, %p115
      %s117 = ssub.s32 %s22, %s34
      %p118 = scmp.eq.s32.totalorder %s117, 0
      %s120 = sadd.s32 %s119, 1
      %s121 = scalar_select %p118, %s119, %s120
      %p124 = pneg %p118
      %p125 = scmp.eq.s32.totalorder %s15, 1
      %p126 = por %p124, %p125
      %p127 = scmp.ne.s32.totalorder %s119, %s122
      %p128 = scmp.eq.s32.totalorder %s15, 0
      %p129 = por %p127, %p128
      %p130 = scmp.ne.s32.totalorder %s119, %s122
      %p131 = scmp.eq.s32.totalorder %s20, 1
      %p132 = por %p130, %p131
      %p133 = scmp.ne.s32.totalorder %s122, %s123
      %p134 = scmp.eq.s32.totalorder %s20, 0
      %p135 = por %p133, %p134
      %p136 = scmp.ne.s32.totalorder %s122, %s123
      %p137 = scmp.eq.s32.totalorder %s21, 1
      %p138 = por %p136, %p137
      %p140 = scmp.ne.s32.totalorder %s123, %s139
      %p141 = scmp.eq.s32.totalorder %s21, 0
      %p142 = por %p140, %p141
      %p143 = scmp.le.s32.totalorder 1, %s15
      %p144 = scmp.lt.s32.totalorder %s15, 3
      %p145 = pnand %p143, %p144
      %p146 = pneg %p145
      // Predicated region
      $region9: #{tpu_custom_call.1} parent=5 // pred_check
        _
      $region10: #{tpu_custom_call.1} parent=5 // pred_check_branch
        %148 = sbr.rel (%p145) target = $region12
      $region11: #{tpu_custom_call.1} parent=5 // pred_region
        %s149 = ssub.s32 %s15, 1
      $region12: #{tpu_custom_call.1} parent=5 // pred_fallthru
        _
      %p150 = scmp.lt.s32.totalorder %s15, 2
      // Predicated region
      $region13: #{tpu_custom_call.1} parent=5 // pred_check
        %p151 = pneg %p150
      $region14: #{tpu_custom_call.1} parent=5 // pred_check_branch
        %153 = sbr.rel (%p151) target = $region16
      $region15: #{tpu_custom_call.1} parent=5 // pred_region
        // Predicated region
        $region17: #{tpu_custom_call.1} parent=15 // pred_check
          %p154 = pneg %p49
        $region18: #{tpu_custom_call.1} parent=15 // pred_check_branch
          %156 = sbr.rel (%p154) target = $region20
        $region19: #{tpu_custom_call.1} parent=15 // pred_region
          %s157 = sand.u32 %s39, 1
          %s158 = scalar_lea.sflag [#allocation8], %s157
          %s159 = sand.u32 %s39, 1
          %s160 = smul.addr %s159, 16
          %s161 = scalar_lea.vmem [#allocation7], %s160
          %s162 = smul.u32 2, %s23
          %s164 = ssub.s32 256, 256
          %165 = vsyncadd %s158, %s164
          %s166 = smul.addr %s22, 2
          %s167 = sadd.s32 %s162, %s166
          %s168 = smul.addr %s167, 128
          %s169 = scalar_lea.hbm %s0, %s168
          %s171 = sshll.u32 %s161, 4
          %s172 = int_to_ptr.vmem [resolvable:$true] %s171
          %174 = dma.hbm_to_vmem [thread:$0]  %s169, 256, %s172, %s158
        $region20: #{tpu_custom_call.1} parent=15 // pred_fallthru
          _
        // Predicated region
        $region21: #{tpu_custom_call.1} parent=15 // pred_check
          %p175 = pneg %p75
        $region22: #{tpu_custom_call.1} parent=15 // pred_check_branch
          %177 = sbr.rel (%p175) target = $region24
        $region23: #{tpu_custom_call.1} parent=15 // pred_region
          %p178 = scmp.lt.s32.totalorder %s22, 1
          %s179 = scalar_select %p178, %s22, 1
          %s180 = smul.addr %s179, 8
          %s181 = scalar_lea.vmem %s1, %s180
        $region24: #{tpu_custom_call.1} parent=15 // pred_fallthru
          _
        // Predicated region
        $region25: #{tpu_custom_call.1} parent=15 // pred_check
          %p182 = pneg %p103
        $region26: #{tpu_custom_call.1} parent=15 // pred_check_branch
          %184 = sbr.rel (%p182) target = $region28
        $region27: #{tpu_custom_call.1} parent=15 // pred_region
          %s185 = smul.u32 2, %s23
          %p186 = scmp.lt.s32.totalorder %s22, 1
          %s187 = scalar_select %p186, %s22, 1
          %p188 = scmp.lt.s32.totalorder %s185, 1
          %s189 = scalar_select %p188, %s185, 1
          %s190 = smul.addr %s187, 2
          %s191 = sadd.s32 %s189, %s190
          %s192 = scalar_lea.vmem %s2, %s191
          %s193 = smul.u32 2, %s23
        $region28: #{tpu_custom_call.1} parent=15 // pred_fallthru
          _
      $region16: #{tpu_custom_call.1} parent=5 // pred_fallthru
        _
      %p194 = scmp.le.s32.totalorder 1, %s15
      %p195 = scmp.lt.s32.totalorder %s15, 3
      %p196 = pnand %p194, %p195
      %p197 = pneg %p196
      // Predicated region
      $region29: #{tpu_custom_call.1} parent=5 // pred_check
        _
      $region30: #{tpu_custom_call.1} parent=5 // pred_check_branch
        %199 = sbr.rel (%p196) target = $region32
      $region31: #{tpu_custom_call.1} parent=5 // pred_region
        %s200 = ssub.s32 %s15, 1
        %s201 = sand.u32 %s42, 1
        %s202 = scalar_lea.sflag [#allocation8], %s201
        %s203 = sand.u32 %s42, 1
        %s204 = smul.addr %s203, 16
        %s205 = scalar_lea.vmem [#allocation7], %s204
        // Predicated region
        $region33: #{tpu_custom_call.1} parent=31 // pred_check
          %p206 = pneg %p55
        $region34: #{tpu_custom_call.1} parent=31 // pred_check_branch
          %208 = sbr.rel (%p206) target = $region36
        $region35: #{tpu_custom_call.1} parent=31 // pred_region
          %209 = dma.done %s202, 256
        $region36: #{tpu_custom_call.1} parent=31 // pred_fallthru
          _
        %s210 = sand.u32 %s42, 1
        %s211 = scalar_lea.sflag [#allocation8], %s210
        %s212 = sand.u32 %s42, 1
        %s213 = smul.addr %s212, 16
        %s214 = scalar_lea.vmem [#allocation7], %s213
        %p215 = pneg %p55
        %p216 = pneg %p52
        %p217 = scmp.lt.s32.totalorder %s24, 1
        %s218 = scalar_select %p217, %s24, 1
        %s219 = smul.addr %s218, 8
        %s220 = scalar_lea.vmem %s1, %s219
        %p221 = pneg %p81
        %p222 = pneg %p78
        %s223 = smul.u32 2, %s25
        %p224 = scmp.lt.s32.totalorder %s24, 1
        %s225 = scalar_select %p224, %s24, 1
        %p226 = scmp.lt.s32.totalorder %s223, 1
        %s227 = scalar_select %p226, %s223, 1
        %s228 = smul.addr %s225, 2
        %s229 = sadd.s32 %s227, %s228
        %s230 = scalar_lea.vmem %s2, %s229
        %p231 = pneg %p109
        %p232 = pneg %p106
        %p233 = pneg %p135
        %p234 = pneg %p132
        %s235 = sand.u32 %s122, 1
        %s236 = scalar_lea.sflag [#allocation9], %s235
        %s237 = sand.u32 %s122, 1
        %s238 = scalar_lea.vmem [#allocation10], %s237
        %s239 = smul.u32 2, %s25
        %p240 = scmp.lt.s32.totalorder %s24, 1
        %s241 = scalar_select %p240, %s24, 1
        %s242 = smul.addr %s241, 8
        %s243 = scalar_lea.vmem %s1, %s242
        %s244 = smul.u32 2, %s25
        %p245 = scmp.lt.s32.totalorder %s24, 1
        %s246 = scalar_select %p245, %s24, 1
        %p247 = scmp.lt.s32.totalorder %s244, 1
        %s248 = scalar_select %p247, %s244, 1
        %s249 = smul.addr %s246, 2
        %s250 = sadd.s32 %s248, %s249
        %s251 = scalar_lea.vmem %s2, %s250
        %s252 = smul.u32 2, %s25
        %p253 = scmp.eq.s32.totalorder %s25, 0
        // Predicated region
        $region37: #{tpu_custom_call.1} parent=31 // pred_check
          %p254 = pneg %p253
        $region38: #{tpu_custom_call.1} parent=31 // pred_check_branch
          %256 = sbr.rel (%p254) target = $region40
        $region39: #{tpu_custom_call.1} parent=31 // pred_region
          %vm257 = vcmask 7168
          %258 = vst.msk [vmem:[#allocation2] sm:$0xff] %vm257, -inf
          %259 = vst.msk [vmem:[#allocation3] sm:$0xff] %vm257, 0.0
          %vm260 = vcmask 0
          %261 = vst.msk [vmem:[#allocation4] sm:$0x1] %vm260, 0.0
          %262 = vst.msk [vmem:[#allocation5] sm:$0x1] %vm260, 0.0
          %263 = vst.msk [vmem:[#allocation6] sm:$0x1] %vm260, 0.0
        $region40: #{tpu_custom_call.1} parent=31 // pred_fallthru
          _
        %v264 = vld [vmem:[%s205] ss:$8 sm:$0x3]
        %s265 = scalar_lea.vmem %s205, 1 [#allocation7]
        %v266 = vld [vmem:[%s265] ss:$8 sm:$0x3]
        %s267 = scalar_lea.vmem %s205, 2 [#allocation7]
        %v268 = vld [vmem:[%s267] ss:$8 sm:$0x3]
        %s269 = scalar_lea.vmem %s205, 3 [#allocation7]
        %v270 = vld [vmem:[%s269] ss:$8 sm:$0x3]
        %s271 = scalar_lea.vmem %s205, 4 [#allocation7]
        %v272 = vld [vmem:[%s271] ss:$8 sm:$0x3]
        %s273 = scalar_lea.vmem %s205, 5 [#allocation7]
        %v274 = vld [vmem:[%s273] ss:$8 sm:$0x3]
        %v275 = vld [vmem:[%s251] sm:$0x3]
        %v276 = vsub.f32 %v274, %v275
        %s277 = smul.u32 %s25, 256
        %v278 = vlaneseq
        %v279 = vand.u32 %v278, 127
        %v280 = vadd.s32 %v279, 128
        %v281 = vstv %s277
        %v282 = vadd.s32 %v281, %v279
        %v283 = vadd.s32 %v281, %v280
        %v284 = vld [vmem:[#allocation4] sm:$0x1]
        %v286 = vlaneseq
        %v287 = vshrl.u32 %v286, 7
        %v288 = vsub.s32 0, %v287
        %v289 = vrot.slane %v264, %v288
        %v290 = vlaneseq
        %v291 = vshrl.u32 %v290, 7
        %v292 = vsub.s32 1, %v291
        %v293 = vrot.slane %v264, %v292
        %vm296 = vcmask 1040384
        %v297 = vsel %vm296, %v289, 0.0
        %v298 = vsel %vm296, %v293, 0.0
        %v299 = vadd.f32 %v297, %v298
        %300 = vadd.xlane.f32.xlu0 %v299
        %v301 = vpop.xlane.xlu0 %300
        %v302 = vrot.slane %v301, 4
        %v303 = vadd.f32 %v301, %v302
        %v304 = vrot.slane %v303, 2
        %v305 = vadd.f32 %v303, %v304
        %v306 = vrot.slane %v305, 1
        %v307 = vadd.f32 %v305, %v306
        %s308 = vtos %v307
        %v309 = vstv %s308
        %v310 = vadd.f32 %v284, %v309
        %vm311 = vcmask 0
        %312 = vst.msk [vmem:[#allocation4] sm:$0x1] %vm311, %v310
        %v313 = vld [vmem:[#allocation5] sm:$0x1]
        %v314 = vmul.f32 %v264, %v264
        %v315 = vsub.f32 %v264, %v314
        %v317 = vlaneseq
        %v318 = vshrl.u32 %v317, 7
        %v319 = vsub.s32 0, %v318
        %v320 = vrot.slane %v315, %v319
        %v321 = vlaneseq
        %v322 = vshrl.u32 %v321, 7
        %v323 = vsub.s32 1, %v322
        %v324 = vrot.slane %v315, %v323
        %v327 = vsel %vm296, %v320, 0.0
        %v328 = vsel %vm296, %v324, 0.0
        %v329 = vadd.f32 %v327, %v328
        %330 = vadd.xlane.f32.xlu0 %v329
        %v331 = vpop.xlane.xlu0 %330
        %v332 = vrot.slane %v331, 4
        %v333 = vadd.f32 %v331, %v332
        %v334 = vrot.slane %v333, 2
        %v335 = vadd.f32 %v333, %v334
        %v336 = vrot.slane %v335, 1
        %v337 = vadd.f32 %v335, %v336
        %s338 = vtos %v337
        %v339 = vstv %s338
        %v340 = vadd.f32 %v313, %v339
        %341 = vst.msk [vmem:[#allocation5] sm:$0x1] %vm311, %v340
        %v342 = vld [vmem:[#allocation6] sm:$0x1]
        %v343 = vmul.f32 %v276, %v276
        %v345 = vlaneseq
        %v346 = vshrl.u32 %v345, 7
        %v347 = vsub.s32 0, %v346
        %v348 = vrot.slane %v343, %v347
        %v349 = vlaneseq
        %v350 = vshrl.u32 %v349, 7
        %v351 = vsub.s32 1, %v350
        %v352 = vrot.slane %v343, %v351
        %v355 = vsel %vm296, %v348, 0.0
        %v356 = vsel %vm296, %v352, 0.0
        %v357 = vadd.f32 %v355, %v356
        %358 = vadd.xlane.f32.xlu0 %v357
        %v359 = vpop.xlane.xlu0 %358
        %v360 = vrot.slane %v359, 4
        %v361 = vadd.f32 %v359, %v360
        %v362 = vrot.slane %v361, 2
        %v363 = vadd.f32 %v361, %v362
        %v364 = vrot.slane %v363, 1
        %v365 = vadd.f32 %v363, %v364
        %s366 = vtos %v365
        %v367 = vstv %s366
        %v368 = vadd.f32 %v342, %v367
        %369 = vst.msk [vmem:[#allocation6] sm:$0x1] %vm311, %v368
        %v370 = vcvt.s32.f32 %v282
        %v371 = vcvt.s32.f32 %v283
        %v372 = vadd.f32 %v370, 0.5
        %v373 = vadd.f32 %v371, 0.5
        %v374 = vmul.f32 %v372, 0.0625
        %v375 = vmul.f32 %v373, 0.0625
        %v376 = vfloor.f32 %v374
        %v377 = vfloor.f32 %v375
        %v378 = vmul.f32 %v376, 16.0
        %v379 = vmul.f32 %v377, 16.0
        %v380 = vsub.f32 %v370, %v378
        %v381 = vsub.f32 %v371, %v379
        %v382 = vadd.f32 %v376, 0.5
        %v383 = vadd.f32 %v377, 0.5
        %v386 = vcombine.low %v382, %v383
        %v388 = vunpack.c.l.s4 1966171168
        %v389 = vunpack.c.0.s8 %v388
        %v390 = vlaneseq
        %v391 = vshrl.u32 %v390, 7
        %v392 = vsub.s32 %v389, %v391
        %v393 = vrot.slane %v386, %v392
        %v395 = vunpack.c.l.s4 1966171168
        %v396 = vunpack.c.0.s8 %v395
        %v397 = vlaneseq
        %v398 = vshrl.u32 %v397, 7
        %v399 = vsub.s32 %v396, %v398
        %v400 = vrot.slane %v393, %v399
        %v402 = vadd.f32 %v266, %v400
        %v403 = vadd.f32 %v380, 0.5
        %v404 = vadd.f32 %v381, 0.5
        %v407 = vcombine.low %v403, %v404
        %v409 = vunpack.c.l.s4 1966171168
        %v410 = vunpack.c.0.s8 %v409
        %v411 = vlaneseq
        %v412 = vshrl.u32 %v411, 7
        %v413 = vsub.s32 %v410, %v412
        %v414 = vrot.slane %v407, %v413
        %v416 = vunpack.c.l.s4 1966171168
        %v417 = vunpack.c.0.s8 %v416
        %v418 = vlaneseq
        %v419 = vshrl.u32 %v418, 7
        %v420 = vsub.s32 %v417, %v419
        %v421 = vrot.slane %v414, %v420
        %v423 = vadd.f32 %v268, %v421
        %v424 = vrcp.pop %v270
        %v425 = vrcp.pop %v272
        %v426 = vmul.f32 %v264, %v424
        %v427 = vmul.f32 %v426, %v425
        %v428 = vlog2.pop %v427
        %v429 = vmul.f32 %v428, 0.6931472
        %v430 = vsub.f32 %v429, 1.837877
        %v431 = vmul.f32 %v424, 0.70710677
        %v432 = vmul.f32 %v425, 0.70710677
        %v433 = vld [vmem:[%s243] sm:$0xff]
        %435 = vset.pattern.permute.xlu0 0
        %436 = vperm.xlu0 %435, %v433
        %v437 = vpop.permute.xlu0 %436
        %v440 = vlaneseq
        %v441 = vshrl.u32 %v440, 7
        %v442 = vsub.s32 0, %v441
        %v443 = vrot.slane %v402, %v442
        %v444 = vlaneseq
        %v445 = vshrl.u32 %v444, 7
        %v446 = vsub.s32 1, %v445
        %v447 = vrot.slane %v402, %v446
        %v450 = vsub.f32 %v437, %v443
        %v451 = vsub.f32 %v437, %v447
        %v453 = vlaneseq
        %v454 = vshrl.u32 %v453, 7
        %v455 = vsub.s32 0, %v454
        %v456 = vrot.slane %v431, %v455
        %v457 = vlaneseq
        %v458 = vshrl.u32 %v457, 7
        %v459 = vsub.s32 1, %v458
        %v460 = vrot.slane %v431, %v459
        %v463 = vmul.f32 %v450, %v456
        %v464 = vmul.f32 %v451, %v460
        %465 = vset.pattern.permute.xlu0 1
        %466 = vperm.xlu0 %465, %v433
        %v467 = vpop.permute.xlu0 %466
        %v470 = vlaneseq
        %v471 = vshrl.u32 %v470, 7
        %v472 = vsub.s32 0, %v471
        %v473 = vrot.slane %v423, %v472
        %v474 = vlaneseq
        %v475 = vshrl.u32 %v474, 7
        %v476 = vsub.s32 1, %v475
        %v477 = vrot.slane %v423, %v476
        %v480 = vsub.f32 %v467, %v473
        %v481 = vsub.f32 %v467, %v477
        %v483 = vlaneseq
        %v484 = vshrl.u32 %v483, 7
        %v485 = vsub.s32 0, %v484
        %v486 = vrot.slane %v432, %v485
        %v487 = vlaneseq
        %v488 = vshrl.u32 %v487, 7
        %v489 = vsub.s32 1, %v488
        %v490 = vrot.slane %v432, %v489
        %v493 = vmul.f32 %v480, %v486
        %v494 = vmul.f32 %v481, %v490
        %v495 = vmul.f32 %v463, %v463
        %v496 = vmul.f32 %v464, %v464
        %v498 = vlaneseq
        %v499 = vshrl.u32 %v498, 7
        %v500 = vsub.s32 0, %v499
        %v501 = vrot.slane %v430, %v500
        %v502 = vlaneseq
        %v503 = vshrl.u32 %v502, 7
        %v504 = vsub.s32 1, %v503
        %v505 = vrot.slane %v430, %v504
        %v508 = vsub.f32 %v501, %v495
        %v509 = vsub.f32 %v505, %v496
        %v510 = vmul.f32 %v493, %v493
        %v511 = vmul.f32 %v494, %v494
        %v512 = vsub.f32 %v508, %v510
        %v513 = vsub.f32 %v509, %v511
        %v514 = vld [vmem:[#allocation2] sm:$0xff]
        %v515 = vmax.f32 %v512, %v513
        %516 = vmax.xlane.f32.xlu0 %v515
        %v517 = vpop.xlane.xlu0 %516
        %v518 = vmax.f32 %v514, %v517
        %vm519 = vcmp.eq.f32.partialorder %v518, -inf
        %v520 = vsel %vm519, 0.0, %v518
        %v521 = vld [vmem:[#allocation3] sm:$0xff]
        %v522 = vsub.f32 %v514, %v520
        %v523 = vmul.f32 %v522, 1.442695
        %v524 = vpow.pop %v523
        %v525 = vmul.f32 %v521, %v524
        %527 = vset.pattern.permute.xlu0 0
        %528 = vperm.xlu0 %527, %v520
        %v529 = vpop.permute.xlu0 %528
        %v531 = vsub.f32 %v512, %v529
        %v532 = vsub.f32 %v513, %v529
        %v533 = vmul.f32 %v531, 1.442695
        %v534 = vpow.pop %v533
        %v535 = vmul.f32 %v532, 1.442695
        %v536 = vpow.pop %v535
        %v537 = vadd.f32 %v534, %v536
        %538 = vadd.xlane.f32.xlu0 %v537
        %v539 = vpop.xlane.xlu0 %538
        %v540 = vadd.f32 %v525, %v539
        %vm541 = vcmask 7168
        %542 = vst.msk [vmem:[#allocation3] sm:$0xff] %vm541, %v540
        %543 = vst.msk [vmem:[#allocation2] sm:$0xff] %vm541, %v518
        // Predicated region
        $region41: #{tpu_custom_call.1} parent=31 // pred_check
          %p544 = pneg %p253
        $region42: #{tpu_custom_call.1} parent=31 // pred_check_branch
          %546 = sbr.rel (%p544) target = $region44
        $region43: #{tpu_custom_call.1} parent=31 // pred_region
          %v547 = vld [vmem:[%s243] sm:$0xff]
          %v548 = vld [vmem:[#allocation4] sm:$0x1]
          %v549 = vld [vmem:[#allocation2] sm:$0xff]
          %v550 = vld [vmem:[#allocation3] sm:$0xff]
          %v551 = vlog2.pop %v550
          %v552 = vmul.f32 %v551, 0.6931472
          %v553 = vadd.f32 %v549, %v552
          %v554 = vlog2.pop %v548
          %v555 = vmul.f32 %v554, 0.6931472
          %v557 = vlaneseq
          %v558 = vshrl.u32 %v557, 7
          %v559 = vsub.s32 0, %v558
          %v560 = vrot.slane %v555, %v559
          %v562 = vsub.f32 %v553, %v560
          %v563 = vsub.f32 0.0, %v562
          %565 = vrot.lane.b32.xlu0 %v547, 126
          %v566 = vpop.permute.xlu0 %565
          %v568 = vmul.f32 %v563, %v566
          %v569 = vsel %vm541, %v568, 0.0
          %570 = vadd.xlane.f32.xlu0 %v569
          %v571 = vpop.xlane.xlu0 %570
          %v572 = vrot.slane %v571, 4
          %v573 = vadd.f32 %v571, %v572
          %v574 = vrot.slane %v573, 2
          %v575 = vadd.f32 %v573, %v574
          %v576 = vrot.slane %v575, 1
          %v577 = vadd.f32 %v575, %v576
          %s578 = vtos %v577
          %v579 = vsel %vm541, %v566, 0.0
          %580 = vadd.xlane.f32.xlu0 %v579
          %v581 = vpop.xlane.xlu0 %580
          %v582 = vrot.slane %v581, 4
          %v583 = vadd.f32 %v581, %v582
          %v584 = vrot.slane %v583, 2
          %v585 = vadd.f32 %v583, %v584
          %v586 = vrot.slane %v585, 1
          %v587 = vadd.f32 %v585, %v586
          %s588 = vtos %v587
          %v589 = vstv %s588
          %v590 = vld [vmem:[#allocation5] sm:$0x1]
          %v591 = vrsqrt.pop %v590
          %v592 = vmul.f32 %v590, %v591
          %vm593 = vcmp.eq.f32.partialorder %v590, inf
          %v594 = vsel %vm593, %v590, %v592
          %vm595 = vcmp.eq.f32.partialorder %v590, 0.0
          %v596 = vand.u32 %v590, 2147483648
          %v597 = vsel %vm595, %v596, %v594
          %v598 = vsub.f32 %v589, %v548
          %v599 = vrcp.pop %v597
          %v600 = vmul.f32 %v598, %v599
          %v601 = vmul.f32 %v600, %v600
          %v602 = vmul.f32 %v601, -0.5
          %v603 = vlog2.pop %v597
          %v604 = vmul.f32 %v603, 0.6931472
          %v605 = vsub.f32 %v602, %v604
          %v606 = vsub.f32 %v605, 0.9189385
          %v607 = vsub.f32 0.0, %v606
          %v608 = vmul.f32 %v607, %v589
          %vm609 = vcmp.eq.s32.totalorder %v279, 0
          %v610 = vstv %s578
          %v611 = vsel %vm609, %v610, 0.0
          %vm612 = vcmp.eq.s32.totalorder %v279, 1
          %614 = vset.pattern.permute.xlu0 0
          %615 = vperm.xlu0 %614, %v608
          %v616 = vpop.permute.xlu0 %615
          %v618 = vlaneseq
          %v619 = vshrl.u32 %v618, 7
          %v620 = vsub.s32 0, %v619
          %v621 = vrot.slane %v616, %v620
          %v622 = vsel %vm612, %v621, 0.0
          %v623 = vadd.f32 %v611, %v622
          %vm624 = vcmp.eq.s32.totalorder %v279, 2
          %v625 = vld [vmem:[#allocation6] sm:$0x1]
          %627 = vset.pattern.permute.xlu0 0
          %628 = vperm.xlu0 %627, %v625
          %v629 = vpop.permute.xlu0 %628
          %v631 = vlaneseq
          %v632 = vshrl.u32 %v631, 7
          %v633 = vsub.s32 0, %v632
          %v634 = vrot.slane %v629, %v633
          %v635 = vsel %vm624, %v634, 0.0
          %v636 = vadd.f32 %v623, %v635
          %vm637 = vcmask 57344
          %638 = vst.msk [vmem:[%s238] sm:$0x1] %vm637, %v636
        $region44: #{tpu_custom_call.1} parent=31 // pred_fallthru
          _
        %s639 = sand.u32 %s122, 1
        %s640 = scalar_lea.sflag [#allocation9], %s639
        %s641 = sand.u32 %s122, 1
        %s642 = scalar_lea.vmem [#allocation10], %s641
        // Predicated region
        $region45: #{tpu_custom_call.1} parent=31 // pred_check
          %p643 = pneg %p132
        $region46: #{tpu_custom_call.1} parent=31 // pred_check_branch
          %645 = sbr.rel (%p643) target = $region48
        $region47: #{tpu_custom_call.1} parent=31 // pred_region
          %s647 = ssub.s32 16, 16
          %648 = vsyncadd %s640, %s647
          %s649 = smul.addr %s24, 16
          %s650 = scalar_lea.hbm %s3, %s649
          %s652 = sshll.u32 %s642, 4
          %s653 = int_to_ptr.vmem [resolvable:$true] %s652
          %655 = dma.vmem_to_hbm [thread:$0]  %s653, 16, %s650, %s640
        $region48: #{tpu_custom_call.1} parent=31 // pred_fallthru
          _
      $region32: #{tpu_custom_call.1} parent=5 // pred_fallthru
        _
      %p656 = scmp.le.s32.totalorder 2, %s15
      // Predicated region
      $region49: #{tpu_custom_call.1} parent=5 // pred_check
        %p657 = pneg %p656
      $region50: #{tpu_custom_call.1} parent=5 // pred_check_branch
        %659 = sbr.rel (%p657) target = $region52
      $region51: #{tpu_custom_call.1} parent=5 // pred_region
        %s660 = ssub.s32 %s15, 2
        // Predicated region
        $region53: #{tpu_custom_call.1} parent=51 // pred_check
          %p661 = pneg %p138
        $region54: #{tpu_custom_call.1} parent=51 // pred_check_branch
          %663 = sbr.rel (%p661) target = $region56
        $region55: #{tpu_custom_call.1} parent=51 // pred_region
          %s664 = sand.u32 %s123, 1
          %s665 = scalar_lea.sflag [#allocation9], %s664
          %s666 = sand.u32 %s123, 1
          %s667 = scalar_lea.vmem [#allocation10], %s666
          %668 = dma.done %s665, 16
        $region56: #{tpu_custom_call.1} parent=51 // pred_fallthru
          _
      $region52: #{tpu_custom_call.1} parent=5 // pred_fallthru
        _
    $region6: #{tpu_custom_call.1} parent=1 // loop_footer
      %s19 = sadd.s32 1, %s15
    $region7: #{tpu_custom_call.1} parent=1 // loop_footer_branch
      %14 = sbr.rel target = $region3
    $region8: #{tpu_custom_call.1} parent=1 // loop_exit
      _
    %669 = vsyncpa [#allocation8], 1
    %s670 = scalar_lea.sflag [#allocation8], 1
    %671 = vsyncpa %s670, 1
    %672 = vsyncpa [#allocation9], 1
    %s673 = scalar_lea.sflag [#allocation9], 1
    %674 = vsyncpa %s673, 1

</llo_original>
